<compile_context>
chip_gen: v7x
topology: tpu7x:2x2x1
jax: 0.10.0
libtpu: 0.0.40
codegen_flags: <defaults>
</compile_context>

<pallas_src>
import functools
import math

import jax
import jax.numpy as jnp
from jax import lax
from jax.experimental import pallas as pl
from jax.experimental.pallas import tpu as pltpu


def _round_up(x, m):
    return ((x + m - 1) // m) * m


def _pick_tile(m, candidates=(512, 256, 128, 64, 32, 16, 8)):
    for c in candidates:
        if m % c == 0 and m >= c:
            return c
    return m


def _pick_time_chunk(t):
    return 32 if t >= 32 else _round_up(max(t, 1), 8)


# ---------------------------------------------------------------------------
# Pallas kernels
# ---------------------------------------------------------------------------
def input_proj_kernel(x_ref, w_ref, b_ref, o_ref):
    """gates_x = X @ W_ih + (b_ih + b_hr/b_hz folded). One big parallel GEMM."""
    o_ref[...] = (jnp.dot(x_ref[...], w_ref[...],
                          preferred_element_type=jnp.float32)
                  + b_ref[...]).astype(o_ref.dtype)


def gru_layer_kernel(gx_ref, whh_ref, bhn_ref, out_ref, h_ref, *, chunk, hidden):
    """Sequential part of a non-final GRU layer (time-major layout).

    gx_ref  : (Tc, Bb, 3H)  precomputed input gates for this time chunk
    whh_ref : (H, 3H)       concatenated recurrent weights (gate order r, z, n)
    bhn_ref : (1, H)        recurrent bias of the n gate only (r/z folded upstream)
    out_ref : (Tc, Bb, H)   per-step hidden states (consumed by the next layer)
    h_ref   : (Bb, H)       VMEM scratch carry, persists across time-chunk grid steps
    """
    c = pl.program_id(1)

    @pl.when(c == 0)
    def _():
        h_ref[...] = jnp.zeros_like(h_ref)

    H = hidden
    whh = whh_ref[...]                                   # loaded once per chunk
    bhn = jnp.broadcast_to(bhn_ref[...].astype(jnp.float32), h_ref.shape)

    def step(i, h):
        gx = gx_ref[i].astype(jnp.float32)               # dense (Bb, 3H) slab
        gh = jnp.dot(h.astype(whh.dtype), whh,
                     preferred_element_type=jnp.float32)
        r = jax.nn.sigmoid(gx[:, :H] + gh[:, :H])
        z = jax.nn.sigmoid(gx[:, H:2 * H] + gh[:, H:2 * H])
        n = jnp.tanh(gx[:, 2 * H:] + r * (gh[:, 2 * H:] + bhn))
        h_new = n + z * (h - n)                          # == (1-z)*n + z*h
        out_ref[i] = h_new.astype(out_ref.dtype)
        return h_new

    # Register-carried h across the chunk; single scratch write at the end.
    h_ref[...] = lax.fori_loop(0, chunk, step, h_ref[...], unroll=min(8, chunk))


def gru_last_layer_kernel(gx_ref, whh_ref, bhn_ref, fcw_ref, fcb_ref, out_ref,
                          h_ref, *, chunk, hidden, t_last, capture):
    """Final GRU layer with the FC head fused into the last grid step.

    Never writes the (T,B,H) per-step output (it is never consumed); only the
    (Bb, O) FC result is produced.
    """
    c = pl.program_id(1)

    @pl.when(c == 0)
    def _():
        h_ref[...] = jnp.zeros_like(h_ref)

    H = hidden
    whh = whh_ref[...]
    bhn = jnp.broadcast_to(bhn_ref[...].astype(jnp.float32), h_ref.shape)
    base = c * chunk

    def cell(i, h):
        gx = gx_ref[i].astype(jnp.float32)
        gh = jnp.dot(h.astype(whh.dtype), whh,
                     preferred_element_type=jnp.float32)
        r = jax.nn.sigmoid(gx[:, :H] + gh[:, :H])
        z = jax.nn.sigmoid(gx[:, H:2 * H] + gh[:, H:2 * H])
        n = jnp.tanh(gx[:, 2 * H:] + r * (gh[:, 2 * H:] + bhn))
        return n + z * (h - n)

    h0 = h_ref[...]
    if capture:
        # T was padded: grab the hidden state at the true last timestep with a
        # cheap off-critical-path select (only ever fires in the last chunk).
        def step(i, carry):
            h, h_cap = carry
            h_new = cell(i, h)
            h_cap = jnp.where(base + i == t_last, h_new, h_cap)
            return h_new, h_cap
        h_final, h_last = lax.fori_loop(0, chunk, step, (h0, h0),
                                        unroll=min(8, chunk))
    else:
        h_final = lax.fori_loop(0, chunk, cell, h0, unroll=min(8, chunk))
        h_last = h_final

    h_ref[...] = h_final

    @pl.when(c == pl.num_programs(1) - 1)
    def _():
        out_ref[...] = (jnp.dot(h_last.astype(fcw_ref.dtype), fcw_ref[...],
                                preferred_element_type=jnp.float32)
                        + fcb_ref[...]).astype(out_ref.dtype)


# ---------------------------------------------------------------------------
# pallas_call wrappers
# ---------------------------------------------------------------------------
_VMEM_LIMIT = 64 * 1024 * 1024


def input_projection(x2d, w, b, *, out_dtype):
    """x2d: (M, D), w: (D, N), b: (1, N) -> (M, N). M is padded to a multiple of 8."""
    M, D = x2d.shape
    N = w.shape[1]
    tm = _pick_tile(M)
    tn = N if N <= 1536 else N // 3            # tile the 3H output dim when large
    return pl.pallas_call(
        input_proj_kernel,
        out_shape=jax.ShapeDtypeStruct((M, N), out_dtype),
        grid_spec=pltpu.PrefetchScalarGridSpec(
            num_scalar_prefetch=0,
            grid=(M // tm, N // tn),
            in_specs=[pl.BlockSpec((tm, D), lambda i, j: (i, 0)),
                      pl.BlockSpec((D, tn), lambda i, j: (0, j)),
                      pl.BlockSpec((1, tn), lambda i, j: (0, j))],
            out_specs=pl.BlockSpec((tm, tn), lambda i, j: (i, j)),
        ),
        compiler_params=pltpu.CompilerParams(
            dimension_semantics=("parallel", "parallel"),
            vmem_limit_bytes=_VMEM_LIMIT),
    )(x2d, w, b)


def gru_layer(gates_x, whh, bhn, *, chunk, n_bb, out_dtype):
    """gates_x: (T_pad, B_pad, 3H) time-major -> per-step hidden (T_pad, B_pad, H)."""
    Tp, Bp, G = gates_x.shape
    H = whh.shape[0]
    Bb = Bp // n_bb
    kernel = functools.partial(gru_layer_kernel, chunk=chunk, hidden=H)
    return pl.pallas_call(
        kernel,
        out_shape=jax.ShapeDtypeStruct((Tp, Bp, H), out_dtype),
        grid_spec=pltpu.PrefetchScalarGridSpec(
            num_scalar_prefetch=0,
            grid=(n_bb, Tp // chunk),
            in_specs=[pl.BlockSpec((chunk, Bb, G), lambda b, c: (c, b, 0)),
                      pl.BlockSpec((H, G), lambda b, c: (0, 0)),
                      pl.BlockSpec((1, H), lambda b, c: (0, 0))],
            out_specs=pl.BlockSpec((chunk, Bb, H), lambda b, c: (c, b, 0)),
            scratch_shapes=[pltpu.VMEM((Bb, H), jnp.float32)],
        ),
        compiler_params=pltpu.CompilerParams(
            dimension_semantics=("parallel", "arbitrary"),
            vmem_limit_bytes=_VMEM_LIMIT),
    )(gates_x, whh, bhn)


def gru_last_layer_fc(gates_x, whh, bhn, fcw, fcb, *, chunk, n_bb, t_true):
    """Final layer recurrence with fused FC head -> (B_pad, O_pad) float32."""
    Tp, Bp, G = gates_x.shape
    H = whh.shape[0]
    O = fcw.shape[1]
    Bb = Bp // n_bb
    kernel = functools.partial(gru_last_layer_kernel, chunk=chunk, hidden=H,
                               t_last=t_true - 1, capture=(Tp != t_true))
    return pl.pallas_call(
        kernel,
        out_shape=jax.ShapeDtypeStruct((Bp, O), jnp.float32),
        grid_spec=pltpu.PrefetchScalarGridSpec(
            num_scalar_prefetch=0,
            grid=(n_bb, Tp // chunk),
            in_specs=[pl.BlockSpec((chunk, Bb, G), lambda b, c: (c, b, 0)),
                      pl.BlockSpec((H, G), lambda b, c: (0, 0)),
                      pl.BlockSpec((1, H), lambda b, c: (0, 0)),
                      pl.BlockSpec((H, O), lambda b, c: (0, 0)),
                      pl.BlockSpec((1, O), lambda b, c: (0, 0))],
            out_specs=pl.BlockSpec((Bb, O), lambda b, c: (b, 0)),
            scratch_shapes=[pltpu.VMEM((Bb, H), jnp.float32)],
        ),
        compiler_params=pltpu.CompilerParams(
            dimension_semantics=("parallel", "arbitrary"),
            vmem_limit_bytes=_VMEM_LIMIT),
    )(gates_x, whh, bhn, fcw, fcb)


# ---------------------------------------------------------------------------
# Parameter packing (one-time; padded, transposed, gate-concatenated, bias-folded)
# ---------------------------------------------------------------------------
def _pack_gate_matrix(w, d_in_pad, h, h_pad):
    """w: (3h, d_in) torch layout [r; z; n] -> (d_in_pad, 3*h_pad), zero-padded."""
    wt = jnp.asarray(w, jnp.float32).T
    d_in = wt.shape[0]
    out = jnp.zeros((d_in_pad, 3 * h_pad), jnp.float32)
    for g in range(3):
        out = out.at[:d_in, g * h_pad:g * h_pad + h].set(wt[:, g * h:(g + 1) * h])
    return out


def _pack_gate_bias(b, h, h_pad):
    out = jnp.zeros((1, 3 * h_pad), jnp.float32)
    for g in range(3):
        out = out.at[0, g * h_pad:g * h_pad + h].set(b[g * h:(g + 1) * h])
    return out


def prepare_params(params, dtype=jnp.float32):
    layers = params["layers"]
    H = layers[0][1].shape[1]
    H_pad = _round_up(H, 128)
    packed = []
    for li, (wih, whh, bih, bhh) in enumerate(layers):
        d_in = wih.shape[1]
        d_in_pad = d_in if li == 0 else H_pad          # layer>0 reads padded hidden
        w_x = _pack_gate_matrix(wih, d_in_pad, H, H_pad).astype(dtype)
        w_h = _pack_gate_matrix(whh, H_pad, H, H_pad).astype(dtype)
        # Fold the r/z recurrent biases into the input-projection bias (off the
        # serial path); keep b_hn separate (PyTorch puts it inside r*(...)).
        b_x = _pack_gate_bias(bih, H, H_pad) \
            + _pack_gate_bias(bhh, H, H_pad).at[:, 2 * H_pad:].set(0.0)
        b_hn = jnp.zeros((1, H_pad), jnp.float32).at[0, :H].set(bhh[2 * H:3 * H])
        packed.append((w_x, w_h, b_x, b_hn))
    O = params["fc_w"].shape[0]
    O_pad = _round_up(O, 128)
    fcw = jnp.zeros((H_pad, O_pad), jnp.float32)
    fcw = fcw.at[:H, :O].set(jnp.asarray(params["fc_w"], jnp.float32).T).astype(dtype)
    fcb = jnp.zeros((1, O_pad), jnp.float32).at[0, :O].set(params["fc_b"])
    return {"layers": packed, "fc_w": fcw, "fc_b": fcb,
            "H": H, "H_pad": H_pad, "O": O, "O_pad": O_pad, "dtype": dtype}


# ---------------------------------------------------------------------------
# Forward pass
# ---------------------------------------------------------------------------
def gru_forward(x, prepared):
    """x: (batch, seq, input_dim) — same convention as the PyTorch module."""
    B, T, _ = x.shape
    H_pad, O = prepared["H_pad"], prepared["O"]
    dtype = prepared["dtype"]

    Tc = _pick_time_chunk(T)
    T_pad = _round_up(T, Tc)
    B_pad = _round_up(B, 8)
    n_bb = 2 if (B_pad >= 16 and B_pad % 16 == 0) else 1   # batch-parallel (v7x 2 TCs)

    # Time-major internal layout: per-step loads/stores in the recurrence are dense
    # (B, *) slabs.  Only the (small) raw input x is transposed once here.
    act = jnp.transpose(x, (1, 0, 2)).astype(dtype)
    act = jnp.pad(act, ((0, T_pad - T), (0, B_pad - B), (0, 0)))

    n_layers = len(prepared["layers"])
    out = None
    for li, (w_x, w_h, b_x, b_hn) in enumerate(prepared["layers"]):
        d_in = w_x.shape[0]
        gates = input_projection(act.reshape(T_pad * B_pad, d_in), w_x, b_x,
                                 out_dtype=dtype)
        gates = gates.reshape(T_pad, B_pad, 3 * H_pad)       # metadata-only reshape
        if li + 1 < n_layers:
            act = gru_layer(gates, w_h, b_hn, chunk=Tc, n_bb=n_bb, out_dtype=dtype)
        else:
            out = gru_last_layer_fc(gates, w_h, b_hn,
                                    prepared["fc_w"], prepared["fc_b"],
                                    chunk=Tc, n_bb=n_bb, t_true=T)
    return out[:B, :O]


# ---------------------------------------------------------------------------
# Pure-JAX reference (for verification)
# ---------------------------------------------------------------------------
def gru_forward_ref(x, params):
    x_tm = jnp.transpose(x, (1, 0, 2)).astype(jnp.float32)
    for (wih, whh, bih, bhh) in params["layers"]:
        H = whh.shape[1]
        B = x_tm.shape[1]

        def step(h, xt):
            gi = xt @ wih.T + bih
            gh = h @ whh.T + bhh
            r = jax.nn.sigmoid(gi[:, :H] + gh[:, :H])
            z = jax.nn.sigmoid(gi[:, H:2 * H] + gh[:, H:2 * H])
            n = jnp.tanh(gi[:, 2 * H:] + r * gh[:, 2 * H:])
            h_new = (1.0 - z) * n + z * h
            return h_new, h_new

        h0 = jnp.zeros((B, H), jnp.float32)
        _, outs = lax.scan(step, h0, x_tm)
        x_tm = outs
    return x_tm[-1] @ params["fc_w"].T + params["fc_b"]


# ---------------------------------------------------------------------------
# Deterministic parameter init (PyTorch-style uniform(-1/sqrt(H), 1/sqrt(H)))
# ---------------------------------------------------------------------------
def init_params(key, input_dim, hidden_dim, num_layers, output_dim):
    bound = 1.0 / math.sqrt(hidden_dim)
    layers = []
    d_in = input_dim
    for _ in range(num_layers):
        key, k1, k2, k3, k4 = jax.random.split(key, 5)
        wih = jax.random.uniform(k1, (3 * hidden_dim, d_in), jnp.float32, -bound, bound)
        whh = jax.random.uniform(k2, (3 * hidden_dim, hidden_dim), jnp.float32, -bound, bound)
        bih = jax.random.uniform(k3, (3 * hidden_dim,), jnp.float32, -bound, bound)
        bhh = jax.random.uniform(k4, (3 * hidden_dim,), jnp.float32, -bound, bound)
        layers.append((wih, whh, bih, bhh))
        d_in = hidden_dim
    key, k5, k6 = jax.random.split(key, 3)
    fc_w = jax.random.uniform(k5, (output_dim, hidden_dim), jnp.float32, -bound, bound)
    fc_b = jax.random.uniform(k6, (output_dim,), jnp.float32, -bound, bound)
    return {"layers": layers, "fc_w": fc_w, "fc_b": fc_b}


# ---------------------------------------------------------------------------
if __name__ == "__main__":
    batch, seq, input_dim = 2, 8, 4
    hidden_dim, num_layers, output_dim = 32, 2, 4

    key = jax.random.PRNGKey(0)
    key, kx, kp = jax.random.split(key, 3)
    x = jax.random.normal(kx, (batch, seq, input_dim), jnp.float32)
    params = init_params(kp, input_dim, hidden_dim, num_layers, output_dim)
    ref = gru_forward_ref(x, params)

    # f32 path: tight check against the pure-JAX reference.
    out_f32 = jax.block_until_ready(gru_forward(x, prepare_params(params, jnp.float32)))
    assert out_f32.shape == (batch, output_dim)
    assert jnp.allclose(out_f32, ref, rtol=1e-5, atol=1e-5), (
        f"f32 mismatch: max abs err {jnp.max(jnp.abs(out_f32 - ref))}")

    # bf16 weights + bf16 gates_x path (production config on v6e/v7x): looser tolerance.
    out_bf16 = jax.block_until_ready(gru_forward(x, prepare_params(params, jnp.bfloat16)))
    assert jnp.allclose(out_bf16.astype(jnp.float32), ref, rtol=5e-2, atol=5e-2), (
        f"bf16 mismatch: max abs err {jnp.max(jnp.abs(out_bf16 - ref))}")

    print("KERNEL_OK")
</pallas_src>

<mosaic_0001>
module attributes {stable_mosaic.version = 11 : i64} {
  func.func @input_proj_kernel(%arg0: i32, %arg1: i32, %arg2: memref<64x4xf32, #tpu.memory_space<vmem>>, %arg3: memref<4x384xf32, #tpu.memory_space<vmem>>, %arg4: memref<1x384xf32, #tpu.memory_space<vmem>>, %arg5: memref<64x384xf32, #tpu.memory_space<vmem>>) attributes {dimension_semantics = [#tpu.dimension_semantics<parallel>, #tpu.dimension_semantics<parallel>], iteration_bounds = array<i64: 1, 1>, scalar_prefetch = 0 : i64, scratch_operands = 0 : i64, tpu.core_type = #tpu.core_type<tc>, window_params = [{transform_indices = @transform_0, window_bounds = array<i64: 64, 4>}, {transform_indices = @transform_1, window_bounds = array<i64: 4, 384>}, {transform_indices = @transform_2, window_bounds = array<i64: 1, 384>}, {transform_indices = @transform_3, window_bounds = array<i64: 64, 384>}]} {
    %c0 = arith.constant 0 : index
    %c0_0 = arith.constant 0 : index
    %0 = vector.load %arg2[%c0, %c0_0] : memref<64x4xf32, #tpu.memory_space<vmem>>, vector<64x4xf32>
    %c0_1 = arith.constant 0 : index
    %c0_2 = arith.constant 0 : index
    %1 = vector.load %arg3[%c0_1, %c0_2] : memref<4x384xf32, #tpu.memory_space<vmem>>, vector<4x384xf32>
    %cst = arith.constant dense<0.000000e+00> : vector<64x384xf32>
    %2 = tpu.matmul %0, %1, %cst {dimension_numbers = #tpu.dot_dimension_numbers<[1], [0], [0], [1], [0, 0, 1, 1], [], []>} : vector<64x4xf32>, vector<4x384xf32>, vector<64x384xf32> -> vector<64x384xf32>
    %c0_3 = arith.constant 0 : index
    %c0_4 = arith.constant 0 : index
    %3 = vector.load %arg4[%c0_3, %c0_4] : memref<1x384xf32, #tpu.memory_space<vmem>>, vector<1x384xf32>
    %4 = vector.broadcast %3 : vector<1x384xf32> to vector<64x384xf32>
    %5 = arith.addf %2, %4 : vector<64x384xf32>
    %c0_5 = arith.constant 0 : index
    %c0_6 = arith.constant 0 : index
    %6 = vector.load %arg5[%c0_5, %c0_6] : memref<64x384xf32, #tpu.memory_space<vmem>>, vector<64x384xf32>
    tpu.vector_store %arg5[%c0_5, %c0_6], %5 {strides = array<i32>} : memref<64x384xf32, #tpu.memory_space<vmem>>, vector<64x384xf32>,
    return
  }
  func.func @transform_0(%arg0: i32, %arg1: i32) -> (i32, i32) {
    %c0_i32 = arith.constant 0 : i32
    %c0_i32_0 = arith.constant 0 : i32
    return %arg0, %c0_i32 : i32, i32
  }
  func.func @transform_1(%arg0: i32, %arg1: i32) -> (i32, i32) {
    %c0_i32 = arith.constant 0 : i32
    %c0_i32_0 = arith.constant 0 : i32
    return %c0_i32, %arg1 : i32, i32
  }
  func.func @transform_2(%arg0: i32, %arg1: i32) -> (i32, i32) {
    %c0_i32 = arith.constant 0 : i32
    %c0_i32_0 = arith.constant 0 : i32
    return %c0_i32, %arg1 : i32, i32
  }
  func.func @transform_3(%arg0: i32, %arg1: i32) -> (i32, i32) {
    %c0_i32 = arith.constant 0 : i32
    return %arg0, %arg1 : i32, i32
  }
}

</mosaic_0001>

<llo_original>
// kernel: tpu_custom_call.1
$region0: #{tpu_custom_call.1}
  #allocation0 [shape = 'u32[]', space=smem, size = 0x4, offset = 0x4, fixed_abs, tag = 'smem constant byte address 0x4 - core index']
  #allocation1 [shape = 'u32[144,128]{1,0:T(1,128)}', space=vmem, size = 0x12000, scoped, tag = 'internal scratch']
  %s0 = inlined_call_operand.hbm [shape: f32[64,4], index: 0, kind: input, shape index: {}]
  %s1 = inlined_call_operand.hbm [shape: f32[4,384], index: 1, kind: input, shape index: {}]
  %s2 = inlined_call_operand.hbm [shape: f32[1,384], index: 2, kind: input, shape index: {}]
  %s3 = inlined_call_operand.hbm [shape: f32[64,384], index: 3, kind: output, shape index: {}]
  %s4 = sld [smem:[#allocation0]]
  $region34: #{tpu_custom_call.1} parent=0
    _
  %s6 = ssub.s32 1, %s4
  %s7 = scalar_select 0, %s6, %s4
  $region1: #{tpu_custom_call.1} parent=0
    #allocation2 [shape = 'u8[32768]{0}', space=vmem, size = 0x8000, scoped, tag = 'input window, operand 0, single buffered']
    #allocation3 [shape = 's32[1]{0}', space=sflag, size = 0x4, scoped, tag = 'scoped memory for tpu_custom_call.1']
    #allocation4 [shape = 's32[1]{0}', space=sflag, size = 0x4, scoped, tag = 'scoped memory for tpu_custom_call.1']
    #allocation5 [shape = 'u8[6144]{0}', space=vmem, size = 0x1800, scoped, tag = 'input window, operand 1, single buffered']
    #allocation6 [shape = 's32[1]{0}', space=sflag, size = 0x4, scoped, tag = 'scoped memory for tpu_custom_call.1']
    #allocation7 [shape = 'u8[1536]{0}', space=vmem, size = 0x800, scoped, tag = 'input window, operand 2, single buffered']
    #allocation8 [shape = 'u8[98304]{0}', space=vmem, size = 0x18000, scoped, tag = 'output window, operand 0, single buffered']
    %8 = vsyncpa [#allocation3], 0
    %9 = vsyncpa [#allocation6], 0
    %10 = vsyncpa [#allocation4], 0
    // Predicated region
    $region2: #{tpu_custom_call.1} parent=1 // pred_check
      _
    $region3: #{tpu_custom_call.1} parent=1 // pred_check_branch
      %12 = sbr.rel (0) target = $region5
    $region4: #{tpu_custom_call.1} parent=1 // pred_region
      %s14 = ssub.s32 1024, 1024
      %15 = vsyncadd [#allocation3], %s14
      %s16 = sshll.u32 [#allocation2], 4
      %s17 = int_to_ptr.vmem [resolvable:$true] %s16
      %22 = dma.hbm_to_vmem [thread:$0]  %s0, 1024, %s17, [#allocation3], 128, 128, 8
    $region5: #{tpu_custom_call.1} parent=1 // pred_fallthru
      _
    // Predicated region
    $region6: #{tpu_custom_call.1} parent=1 // pred_check
      _
    $region7: #{tpu_custom_call.1} parent=1 // pred_check_branch
      %24 = sbr.rel (0) target = $region9
    $region8: #{tpu_custom_call.1} parent=1 // pred_region
      %s26 = ssub.s32 192, 192
      %27 = vsyncadd [#allocation6], %s26
      %s29 = sshll.u32 [#allocation5], 4
      %s30 = int_to_ptr.vmem [resolvable:$true] %s29
      %32 = dma.hbm_to_vmem [thread:$0]  %s1, 192, %s30, [#allocation6]
    $region9: #{tpu_custom_call.1} parent=1 // pred_fallthru
      _
    // Predicated region
    $region10: #{tpu_custom_call.1} parent=1 // pred_check
      _
    $region11: #{tpu_custom_call.1} parent=1 // pred_check_branch
      %34 = sbr.rel (0) target = $region13
    $region12: #{tpu_custom_call.1} parent=1 // pred_region
      %s36 = ssub.s32 48, 48
      %37 = vsyncadd [#allocation6], %s36
      %s39 = sshll.u32 [#allocation7], 4
      %s40 = int_to_ptr.vmem [resolvable:$true] %s39
      %42 = dma.hbm_to_vmem [thread:$0]  %s2, 48, %s40, [#allocation6]
    $region13: #{tpu_custom_call.1} parent=1 // pred_fallthru
      _
    // Predicated region
    $region14: #{tpu_custom_call.1} parent=1 // pred_check
      _
    $region15: #{tpu_custom_call.1} parent=1 // pred_check_branch
      %44 = sbr.rel (0) target = $region17
    $region16: #{tpu_custom_call.1} parent=1 // pred_region
      %45 = dma.done [#allocation3], 1024
    $region17: #{tpu_custom_call.1} parent=1 // pred_fallthru
      _
    // Predicated region
    $region18: #{tpu_custom_call.1} parent=1 // pred_check
      _
    $region19: #{tpu_custom_call.1} parent=1 // pred_check_branch
      %47 = sbr.rel (0) target = $region21
    $region20: #{tpu_custom_call.1} parent=1 // pred_region
      %48 = dma.done [#allocation6], 192
    $region21: #{tpu_custom_call.1} parent=1 // pred_fallthru
      _
    // Predicated region
    $region22: #{tpu_custom_call.1} parent=1 // pred_check
      _
    $region23: #{tpu_custom_call.1} parent=1 // pred_check_branch
      %50 = sbr.rel (0) target = $region25
    $region24: #{tpu_custom_call.1} parent=1 // pred_region
      %51 = dma.done [#allocation6], 48
    $region25: #{tpu_custom_call.1} parent=1 // pred_fallthru
      _
    %v52 = vld [vmem:[#allocation2] sm:$0xff]
    %v53 = vld [vmem:[#allocation2 + $0x8] sm:$0xff]
    %v54 = vld [vmem:[#allocation2 + $0x10] sm:$0xff]
    %v55 = vld [vmem:[#allocation2 + $0x18] sm:$0xff]
    %v56 = vld [vmem:[#allocation2 + $0x20] sm:$0xff]
    %v57 = vld [vmem:[#allocation2 + $0x28] sm:$0xff]
    %v58 = vld [vmem:[#allocation2 + $0x30] sm:$0xff]
    %v59 = vld [vmem:[#allocation2 + $0x38] sm:$0xff]
    %v60 = vld [vmem:[#allocation5] sm:$0xff]
    %v61 = vld [vmem:[#allocation5 + $0x8] sm:$0xf]
    %v62 = vld [vmem:[#allocation7] sm:$0x7]
    %v64 = vlaneseq
    %v65 = vshrl.u32 %v64, 7
    %v66 = vsub.s32 0, %v65
    %v67 = vrot.slane %v62, %v66
    %v68 = vlaneseq
    %v69 = vshrl.u32 %v68, 7
    %v70 = vsub.s32 1, %v69
    %v71 = vrot.slane %v62, %v70
    %v72 = vlaneseq
    %v73 = vshrl.u32 %v72, 7
    %v74 = vsub.s32 2, %v73
    %v75 = vrot.slane %v62, %v74
    %v81 = vcombine.high %v60, %v60
    %vm82 = vcmask 31744
    %v84 = vsel %vm82, %v52, 0
    %v87 = vsel %vm82, %v53, 0
    %v90 = vsel %vm82, %v54, 0
    %v93 = vsel %vm82, %v55, 0
    %v96 = vsel %vm82, %v56, 0
    %v99 = vsel %vm82, %v57, 0
    %v102 = vsel %vm82, %v58, 0
    %v105 = vsel %vm82, %v59, 0
    %vm107 = vcmask 1043456
    %v108 = vsel %vm107, %v60, 0
    %v110 = vsel %vm107, %v81, 0
    %v112 = vsel %vm107, %v61, 0
    %114 = vmatprep.subr.mxu0 %v110
    %115 = vmatpush1.msra.mxu0 %v108
    %116 = vmatprep.subr.mxu0 0.0
    %117 = vmatpush1.msra.mxu0 0.0
    %118 = vmatprep.subr.mxu0 0.0
    %119 = vmatpush1.msra.mxu0 0.0
    %120 = vmatprep.subr.mxu0 0.0
    %121 = vmatpush1.msra.mxu0 0.0
    %122 = vmatprep.subr.mxu0 0.0
    %123 = vmatpush1.msra.mxu0 0.0
    %124 = vmatprep.subr.mxu0 0.0
    %125 = vmatpush1.msra.mxu0 0.0
    %126 = vmatprep.subr.mxu0 0.0
    %127 = vmatpush1.msra.mxu0 0.0
    %128 = vmatprep.subr.mxu0 0.0
    %129 = vmatpush1.msra.mxu0 0.0
    %130 = vmatprep.subr.mxu0 0.0
    %131 = vmatpush1.msra.mxu0 0.0
    %132 = vmatprep.subr.mxu0 0.0
    %133 = vmatpush1.msra.mxu0 0.0
    %134 = vmatprep.subr.mxu0 0.0
    %135 = vmatpush1.msra.mxu0 0.0
    %136 = vmatprep.subr.mxu0 0.0
    %137 = vmatpush1.msra.mxu0 0.0
    %138 = vmatprep.subr.mxu0 0.0
    %139 = vmatpush1.msra.mxu0 0.0
    %140 = vmatprep.subr.mxu0 0.0
    %141 = vmatpush1.msra.mxu0 0.0
    %142 = vmatprep.subr.mxu0 0.0
    %143 = vmatpush1.msra.mxu0 0.0
    %144 = vmatprep.subr.mxu0 0.0
    %145 = vmatpush1.msra.mxu0 0.0
    %146 = vmatprep.subr.mxu0 0.0
    %147 = vmatpush1.msra.mxu0 0.0
    %148 = vmatprep.subr.mxu0 0.0
    %149 = vmatpush1.msra.mxu0 0.0
    %150 = vmatprep.subr.mxu0 0.0
    %151 = vmatpush1.msra.mxu0 0.0
    %152 = vmatprep.subr.mxu0 0.0
    %153 = vmatpush1.msra.mxu0 0.0
    %154 = vmatprep.subr.mxu0 0.0
    %155 = vmatpush1.msra.mxu0 0.0
    %156 = vmatprep.subr.mxu0 0.0
    %157 = vmatpush1.msra.mxu0 0.0
    %158 = vmatprep.subr.mxu0 0.0
    %159 = vmatpush1.msra.mxu0 0.0
    %160 = vmatprep.subr.mxu0 0.0
    %161 = vmatpush1.msra.mxu0 0.0
    %162 = vmatprep.subr.mxu0 0.0
    %163 = vmatpush1.msra.mxu0 0.0
    %164 = vmatprep.subr.mxu0 0.0
    %165 = vmatpush1.msra.mxu0 0.0
    %166 = vmatprep.subr.mxu0 0.0
    %167 = vmatpush1.msra.mxu0 0.0
    %168 = vmatprep.subr.mxu0 0.0
    %169 = vmatpush1.msra.mxu0 0.0
    %170 = vmatprep.subr.mxu0 0.0
    %171 = vmatpush1.msra.mxu0 0.0
    %172 = vmatprep.subr.mxu0 0.0
    %173 = vmatpush1.msra.mxu0 0.0
    %174 = vmatprep.subr.mxu0 0.0
    %175 = vmatpush1.msra.mxu0 0.0
    %176 = vmatprep.subr.mxu0 0.0
    %177 = vmatpush1.msra.mxu0 0.0
    %178 = vmatprep.mubr.f32.mxu0 0.0
    %179 = vmatmul.mubr.f32.gmra.mrb[0].mxu0 %v84
    %v180 = vpop.f32.mrb[0].mxu0
    %v181 = vadd.f32 %v67, %v180
    %v182 = vpop.f32.mrb[0].mxu0
    %v183 = vadd.f32 %v71, %v182
    %184 = vmatprep.mubr.f32.mxu0 0.0
    %185 = vmatmul.mubr.f32.gmra.mrb[0].mxu0 %v87
    %v186 = vpop.f32.mrb[0].mxu0
    %v187 = vadd.f32 %v67, %v186
    %v188 = vpop.f32.mrb[0].mxu0
    %v189 = vadd.f32 %v71, %v188
    %190 = vmatprep.mubr.f32.mxu0 0.0
    %191 = vmatmul.mubr.f32.gmra.mrb[0].mxu0 %v90
    %v192 = vpop.f32.mrb[0].mxu0
    %v193 = vadd.f32 %v67, %v192
    %v194 = vpop.f32.mrb[0].mxu0
    %v195 = vadd.f32 %v71, %v194
    %196 = vmatprep.mubr.f32.mxu0 0.0
    %197 = vmatmul.mubr.f32.gmra.mrb[0].mxu0 %v93
    %v198 = vpop.f32.mrb[0].mxu0
    %v199 = vadd.f32 %v67, %v198
    %v200 = vpop.f32.mrb[0].mxu0
    %v201 = vadd.f32 %v71, %v200
    %202 = vmatprep.mubr.f32.mxu0 0.0
    %203 = vmatmul.mubr.f32.gmra.mrb[0].mxu0 %v96
    %v204 = vpop.f32.mrb[0].mxu0
    %v205 = vadd.f32 %v67, %v204
    %v206 = vpop.f32.mrb[0].mxu0
    %v207 = vadd.f32 %v71, %v206
    %208 = vmatprep.mubr.f32.mxu0 0.0
    %209 = vmatmul.mubr.f32.gmra.mrb[0].mxu0 %v99
    %v210 = vpop.f32.mrb[0].mxu0
    %v211 = vadd.f32 %v67, %v210
    %v212 = vpop.f32.mrb[0].mxu0
    %v213 = vadd.f32 %v71, %v212
    %214 = vmatprep.mubr.f32.mxu0 0.0
    %215 = vmatmul.mubr.f32.gmra.mrb[0].mxu0 %v102
    %v216 = vpop.f32.mrb[0].mxu0
    %v217 = vadd.f32 %v67, %v216
    %v218 = vpop.f32.mrb[0].mxu0
    %v219 = vadd.f32 %v71, %v218
    %220 = vmatprep.mubr.f32.mxu0 0.0
    %221 = vmatmul.mubr.f32.gmra.mrb[0].mxu0 %v105
    %v222 = vpop.f32.mrb[0].mxu0
    %v223 = vadd.f32 %v67, %v222
    %v224 = vpop.f32.mrb[0].mxu0
    %v225 = vadd.f32 %v71, %v224
    %226 = vdwg.mxu0
    %227 = vmatprep.subr.mxu0 0.0
    %228 = vmatpush1.msra.mxu0 %v112
    %229 = vmatprep.subr.mxu0 0.0
    %230 = vmatpush1.msra.mxu0 0.0
    %231 = vmatprep.subr.mxu0 0.0
    %232 = vmatpush1.msra.mxu0 0.0
    %233 = vmatprep.subr.mxu0 0.0
    %234 = vmatpush1.msra.mxu0 0.0
    %235 = vmatprep.subr.mxu0 0.0
    %236 = vmatpush1.msra.mxu0 0.0
    %237 = vmatprep.subr.mxu0 0.0
    %238 = vmatpush1.msra.mxu0 0.0
    %239 = vmatprep.subr.mxu0 0.0
    %240 = vmatpush1.msra.mxu0 0.0
    %241 = vmatprep.subr.mxu0 0.0
    %242 = vmatpush1.msra.mxu0 0.0
    %243 = vmatprep.subr.mxu0 0.0
    %244 = vmatpush1.msra.mxu0 0.0
    %245 = vmatprep.subr.mxu0 0.0
    %246 = vmatpush1.msra.mxu0 0.0
    %247 = vmatprep.subr.mxu0 0.0
    %248 = vmatpush1.msra.mxu0 0.0
    %249 = vmatprep.subr.mxu0 0.0
    %250 = vmatpush1.msra.mxu0 0.0
    %251 = vmatprep.subr.mxu0 0.0
    %252 = vmatpush1.msra.mxu0 0.0
    %253 = vmatprep.subr.mxu0 0.0
    %254 = vmatpush1.msra.mxu0 0.0
    %255 = vmatprep.subr.mxu0 0.0
    %256 = vmatpush1.msra.mxu0 0.0
    %257 = vmatprep.subr.mxu0 0.0
    %258 = vmatpush1.msra.mxu0 0.0
    %259 = vmatprep.subr.mxu0 0.0
    %260 = vmatpush1.msra.mxu0 0.0
    %261 = vmatprep.subr.mxu0 0.0
    %262 = vmatpush1.msra.mxu0 0.0
    %263 = vmatprep.subr.mxu0 0.0
    %264 = vmatpush1.msra.mxu0 0.0
    %265 = vmatprep.subr.mxu0 0.0
    %266 = vmatpush1.msra.mxu0 0.0
    %267 = vmatprep.subr.mxu0 0.0
    %268 = vmatpush1.msra.mxu0 0.0
    %269 = vmatprep.subr.mxu0 0.0
    %270 = vmatpush1.msra.mxu0 0.0
    %271 = vmatprep.subr.mxu0 0.0
    %272 = vmatpush1.msra.mxu0 0.0
    %273 = vmatprep.subr.mxu0 0.0
    %274 = vmatpush1.msra.mxu0 0.0
    %275 = vmatprep.subr.mxu0 0.0
    %276 = vmatpush1.msra.mxu0 0.0
    %277 = vmatprep.subr.mxu0 0.0
    %278 = vmatpush1.msra.mxu0 0.0
    %279 = vmatprep.subr.mxu0 0.0
    %280 = vmatpush1.msra.mxu0 0.0
    %281 = vmatprep.subr.mxu0 0.0
    %282 = vmatpush1.msra.mxu0 0.0
    %283 = vmatprep.subr.mxu0 0.0
    %284 = vmatpush1.msra.mxu0 0.0
    %285 = vmatprep.subr.mxu0 0.0
    %286 = vmatpush1.msra.mxu0 0.0
    %287 = vmatprep.subr.mxu0 0.0
    %288 = vmatpush1.msra.mxu0 0.0
    %289 = vmatprep.subr.mxu0 0.0
    %290 = vmatpush1.msra.mxu0 0.0
    %291 = vmatprep.mubr.f32.mxu0 0.0
    %292 = vmatmul.mubr.f32.gmra.mrb[0].mxu0 %v84
    %v293 = vpop.f32.mrb[0].mxu0
    %v294 = vadd.f32 %v75, %v293
    %v295 = vpop.f32.mrb[0].mxu0
    %296 = vmatprep.mubr.f32.mxu0 0.0
    %297 = vmatmul.mubr.f32.gmra.mrb[0].mxu0 %v87
    %v298 = vpop.f32.mrb[0].mxu0
    %v299 = vadd.f32 %v75, %v298
    %v300 = vpop.f32.mrb[0].mxu0
    %301 = vmatprep.mubr.f32.mxu0 0.0
    %302 = vmatmul.mubr.f32.gmra.mrb[0].mxu0 %v90
    %v303 = vpop.f32.mrb[0].mxu0
    %v304 = vadd.f32 %v75, %v303
    %v305 = vpop.f32.mrb[0].mxu0
    %306 = vmatprep.mubr.f32.mxu0 0.0
    %307 = vmatmul.mubr.f32.gmra.mrb[0].mxu0 %v93
    %v308 = vpop.f32.mrb[0].mxu0
    %v309 = vadd.f32 %v75, %v308
    %v310 = vpop.f32.mrb[0].mxu0
    %311 = vmatprep.mubr.f32.mxu0 0.0
    %312 = vmatmul.mubr.f32.gmra.mrb[0].mxu0 %v96
    %v313 = vpop.f32.mrb[0].mxu0
    %v314 = vadd.f32 %v75, %v313
    %v315 = vpop.f32.mrb[0].mxu0
    %316 = vmatprep.mubr.f32.mxu0 0.0
    %317 = vmatmul.mubr.f32.gmra.mrb[0].mxu0 %v99
    %v318 = vpop.f32.mrb[0].mxu0
    %v319 = vadd.f32 %v75, %v318
    %v320 = vpop.f32.mrb[0].mxu0
    %321 = vmatprep.mubr.f32.mxu0 0.0
    %322 = vmatmul.mubr.f32.gmra.mrb[0].mxu0 %v102
    %v323 = vpop.f32.mrb[0].mxu0
    %v324 = vadd.f32 %v75, %v323
    %v325 = vpop.f32.mrb[0].mxu0
    %326 = vmatprep.mubr.f32.mxu0 0.0
    %327 = vmatmul.mubr.f32.gmra.mrb[0].mxu0 %v105
    %v328 = vpop.f32.mrb[0].mxu0
    %v329 = vadd.f32 %v75, %v328
    %v330 = vpop.f32.mrb[0].mxu0
    %331 = vdwg.mxu0
    %332 = vst [vmem:[#allocation8] sm:$0xff] %v181
    %333 = vst [vmem:[#allocation8 + $0x8] sm:$0xff] %v183
    %334 = vst [vmem:[#allocation8 + $0x10] sm:$0xff] %v294
    %335 = vst [vmem:[#allocation8 + $0x18] sm:$0xff] %v187
    %336 = vst [vmem:[#allocation8 + $0x20] sm:$0xff] %v189
    %337 = vst [vmem:[#allocation8 + $0x28] sm:$0xff] %v299
    %338 = vst [vmem:[#allocation8 + $0x30] sm:$0xff] %v193
    %339 = vst [vmem:[#allocation8 + $0x38] sm:$0xff] %v195
    %340 = vst [vmem:[#allocation8 + $0x40] sm:$0xff] %v304
    %341 = vst [vmem:[#allocation8 + $0x48] sm:$0xff] %v199
    %342 = vst [vmem:[#allocation8 + $0x50] sm:$0xff] %v201
    %343 = vst [vmem:[#allocation8 + $0x58] sm:$0xff] %v309
    %344 = vst [vmem:[#allocation8 + $0x60] sm:$0xff] %v205
    %345 = vst [vmem:[#allocation8 + $0x68] sm:$0xff] %v207
    %346 = vst [vmem:[#allocation8 + $0x70] sm:$0xff] %v314
    %347 = vst [vmem:[#allocation8 + $0x78] sm:$0xff] %v211
    %348 = vst [vmem:[#allocation8 + $0x80] sm:$0xff] %v213
    %349 = vst [vmem:[#allocation8 + $0x88] sm:$0xff] %v319
    %350 = vst [vmem:[#allocation8 + $0x90] sm:$0xff] %v217
    %351 = vst [vmem:[#allocation8 + $0x98] sm:$0xff] %v219
    %352 = vst [vmem:[#allocation8 + $0xa0] sm:$0xff] %v324
    %353 = vst [vmem:[#allocation8 + $0xa8] sm:$0xff] %v223
    %354 = vst [vmem:[#allocation8 + $0xb0] sm:$0xff] %v225
    %355 = vst [vmem:[#allocation8 + $0xb8] sm:$0xff] %v329
    // Predicated region
    $region26: #{tpu_custom_call.1} parent=1 // pred_check
      _
    $region27: #{tpu_custom_call.1} parent=1 // pred_check_branch
      %357 = sbr.rel (0) target = $region29
    $region28: #{tpu_custom_call.1} parent=1 // pred_region
      %s359 = ssub.s32 3072, 3072
      %360 = vsyncadd [#allocation4], %s359
      %s361 = sshll.u32 [#allocation8], 4
      %s362 = int_to_ptr.vmem [resolvable:$true] %s361
      %367 = dma.vmem_to_hbm [thread:$0]  %s362, 3072, %s3, [#allocation4], 384, 384, 24
    $region29: #{tpu_custom_call.1} parent=1 // pred_fallthru
      _
    // Predicated region
    $region30: #{tpu_custom_call.1} parent=1 // pred_check
      _
    $region31: #{tpu_custom_call.1} parent=1 // pred_check_branch
      %369 = sbr.rel (0) target = $region33
    $region32: #{tpu_custom_call.1} parent=1 // pred_region
      %370 = dma.done [#allocation4], 3072
    $region33: #{tpu_custom_call.1} parent=1 // pred_fallthru
      _
    %371 = vsyncpa [#allocation3], 1
    %372 = vsyncpa [#allocation6], 1
    %373 = vsyncpa [#allocation4], 1

</llo_original>
